<compile_context>
chip_gen: v7x
topology: tpu7x:2x2x1
jax: 0.10.0
libtpu: 0.0.40
codegen_flags: <defaults>
</compile_context>

<pallas_src>
import jax
import jax.numpy as jnp
from jax.experimental import pallas as pl
from jax.experimental.pallas import tpu as pltpu


def _round_up(n: int, m: int) -> int:
    return ((n + m - 1) // m) * m


def _cdiv(a: int, b: int) -> int:
    return (a + b - 1) // b


def _critic_kernel(s_ref, a_ref, w1s_ref, w1a_ref, b1_ref,
                   w2_ref, b2_ref, w3_ref, b3_ref, o_ref):
    cdt = w1s_ref.dtype  # streaming/compute dtype (bf16 by default, f32 option)
    s = s_ref[...].astype(cdt)
    a = a_ref[...].astype(cdt)

    # Layer 1: fused "concat" -> two MXU passes over resident tiles,
    # f32 accumulation.
    h1 = (jnp.dot(s, w1s_ref[...], preferred_element_type=jnp.float32)
          + jnp.dot(a, w1a_ref[...], preferred_element_type=jnp.float32)
          + b1_ref[...])
    h1 = jnp.maximum(h1, 0.0).astype(cdt)

    # Layer 2: Linear + ReLU (MXU, f32 accumulation).
    h2 = jnp.dot(h1, w2_ref[...], preferred_element_type=jnp.float32) + b2_ref[...]
    h2 = jnp.maximum(h2, 0.0)

    # Layer 3 (out_features == 1): VPU multiply + lane reduction, emitted as a
    # batch-on-lanes row so the output store is lane-dense.
    q = jnp.sum(h2 * w3_ref[...].astype(jnp.float32), axis=-1)        # [tile_b]
    o_ref[...] = (q[None, :] + b3_ref[...]).astype(o_ref.dtype)       # [1, tile_b]


def prepare_critic_params(params, observation_size, *, dtype=jnp.bfloat16):
    """One-time weight preparation (hoisted out of the per-call path).

    Splits W1 into its state / action rows (fused concat inside the kernel),
    reshapes W3 into a lane-dense row, and casts weights to `dtype`
    (bf16 default, MXU-native); biases stay f32.
    """
    w1, b1, w2, b2, w3, b3 = params
    w1s = w1[:observation_size, :].astype(dtype)
    w1a = w1[observation_size:, :].astype(dtype)
    return (
        w1s,
        w1a,
        b1.reshape(1, -1).astype(jnp.float32),
        w2.astype(dtype),
        b2.reshape(1, -1).astype(jnp.float32),
        w3.reshape(1, -1).astype(dtype),
        b3.reshape(1, 1).astype(jnp.float32),
    )


def critic_forward(state, action, prepared_params, *,
                   grid_steps=None, max_tile_b: int = 2048):
    """Pallas equivalent of Critic.forward(state, action) -> [B, 1] Q values."""
    w1s, w1a, b1, w2, b2, w3_row, b3 = prepared_params
    B, obs_dim = state.shape
    Ba, act_dim = action.shape
    assert Ba == B
    assert w1s.shape[0] == obs_dim and w1a.shape[0] == act_dim
    h1_dim = w1s.shape[1]
    h2_dim = w2.shape[1]

    # Grid selection: 1 step by default (per-step overhead dominates for RL
    # batch sizes); >= 2 steps for large batches, which also lets v7x's two
    # TensorCores each take a tile via dimension_semantics=("parallel",).
    if grid_steps is None:
        grid_steps = 1 if B <= 1024 else 2
    grid_steps = max(int(grid_steps), _cdiv(B, max_tile_b))
    if grid_steps == 1:
        tile_b = _round_up(B, 8)
    else:
        # Multi-step grid: the lane-dense [1, tile_b] output block needs a
        # lane dim that is a multiple of 128.
        tile_b = _round_up(_cdiv(B, grid_steps), 128)
    b_pad = grid_steps * tile_b

    if b_pad != B:
        state = jnp.pad(state, ((0, b_pad - B), (0, 0)))
        action = jnp.pad(action, ((0, b_pad - B), (0, 0)))

    batch_map = lambda i: (i, 0)   # batch tiles walk the sublane axis of inputs
    out_map = lambda i: (0, i)     # batch tiles walk the lane axis of the output
    const_map = lambda i: (0, 0)   # weights/biases stay VMEM-resident

    act_bytes = jnp.dtype(state.dtype).itemsize
    w_bytes = jnp.dtype(w1s.dtype).itemsize
    flops = 2 * b_pad * ((obs_dim + act_dim) * h1_dim + h1_dim * h2_dim + h2_dim)
    bytes_accessed = (
        b_pad * (obs_dim + act_dim) * act_bytes
        + ((obs_dim + act_dim) * h1_dim + h1_dim * h2_dim + h2_dim) * w_bytes
        + (h1_dim + h2_dim + 1) * 4
        + b_pad * 4)

    out = pl.pallas_call(
        _critic_kernel,
        out_shape=jax.ShapeDtypeStruct((1, b_pad), jnp.float32),
        grid_spec=pltpu.PrefetchScalarGridSpec(
            num_scalar_prefetch=0,
            grid=(grid_steps,),
            in_specs=[
                pl.BlockSpec((tile_b, obs_dim), batch_map),   # state tile
                pl.BlockSpec((tile_b, act_dim), batch_map),   # action tile
                pl.BlockSpec((obs_dim, h1_dim), const_map),   # W1 (state rows)
                pl.BlockSpec((act_dim, h1_dim), const_map),   # W1 (action rows)
                pl.BlockSpec((1, h1_dim), const_map),         # b1
                pl.BlockSpec((h1_dim, h2_dim), const_map),    # W2
                pl.BlockSpec((1, h2_dim), const_map),         # b2
                pl.BlockSpec((1, h2_dim), const_map),         # W3 (as row)
                pl.BlockSpec((1, 1), const_map),              # b3
            ],
            out_specs=pl.BlockSpec((1, tile_b), out_map),
        ),
        compiler_params=pltpu.CompilerParams(
            dimension_semantics=("parallel",)),
        cost_estimate=pl.CostEstimate(
            flops=flops, transcendentals=0, bytes_accessed=bytes_accessed),
    )(state, action, w1s, w1a, b1, w2, b2, w3_row, b3)

    return out[0, :B].reshape(B, 1)


def init_critic_params(key, observation_size, num_actions, hidden_size=None):
    """Deterministic init mimicking nn.Linear's uniform(-1/sqrt(fan_in), ...)."""
    if hidden_size is None:
        hidden_size = [256, 256]
    dims = [observation_size + num_actions, hidden_size[0], hidden_size[1], 1]
    params = []
    for i in range(3):
        fan_in, fan_out = dims[i], dims[i + 1]
        key, kw, kb = jax.random.split(key, 3)
        bound = 1.0 / jnp.sqrt(jnp.float32(fan_in))
        # stored as [in, out] = PyTorch weight transposed
        w = jax.random.uniform(kw, (fan_in, fan_out), jnp.float32, -bound, bound)
        b = jax.random.uniform(kb, (1, fan_out), jnp.float32, -bound, bound)
        params.extend([w, b])
    return tuple(params)


if __name__ == "__main__":
    # Small shapes consistent with the module.
    batch = 4
    observation_size = 16
    num_actions = 8
    hidden_size = [32, 32]

    key = jax.random.PRNGKey(0)
    k_params, k_state, k_action = jax.random.split(key, 3)

    params = init_critic_params(k_params, observation_size, num_actions, hidden_size)
    state = jax.random.normal(k_state, (batch, observation_size), jnp.float32)
    action = jax.random.normal(k_action, (batch, num_actions), jnp.float32)

    # Pure-JAX f32 reference.
    w1, b1, w2, b2, w3, b3 = params
    oa = jnp.concatenate([state, action], axis=1)
    h = jnp.maximum(oa @ w1 + b1, 0.0)
    h = jnp.maximum(h @ w2 + b2, 0.0)
    q_ref = h @ w3 + b3

    # Default bf16-streaming path (single grid step).
    prepared_bf16 = prepare_critic_params(params, observation_size)
    q = critic_forward(state, action, prepared_bf16)
    jax.block_until_ready(q)
    assert q.shape == (batch, 1)
    assert jnp.allclose(q, q_ref, atol=5e-2, rtol=5e-2)

    # Exact f32 path (same kernel, f32 weights).
    prepared_f32 = prepare_critic_params(params, observation_size, dtype=jnp.float32)
    q32 = critic_forward(state, action, prepared_f32)
    jax.block_until_ready(q32)
    assert jnp.allclose(q32, q_ref, atol=1e-5, rtol=1e-5)

    # Multi-step grid path (as used for large batches / both v7x TensorCores).
    big_b = 192
    k_s2, k_a2 = jax.random.split(jax.random.PRNGKey(1))
    state2 = jax.random.normal(k_s2, (big_b, observation_size), jnp.float32)
    action2 = jax.random.normal(k_a2, (big_b, num_actions), jnp.float32)
    q2 = critic_forward(state2, action2, prepared_f32, grid_steps=2)
    jax.block_until_ready(q2)
    oa2 = jnp.concatenate([state2, action2], axis=1)
    h2r = jnp.maximum(oa2 @ w1 + b1, 0.0)
    h2r = jnp.maximum(h2r @ w2 + b2, 0.0)
    q2_ref = h2r @ w3 + b3
    assert q2.shape == (big_b, 1)
    assert jnp.allclose(q2, q2_ref, atol=1e-5, rtol=1e-5)

    print("KERNEL_OK")
</pallas_src>

<mosaic_0001>
module attributes {stable_mosaic.version = 11 : i64} {
  func.func @_critic_kernel(%arg0: i32, %arg1: memref<8x16xf32, #tpu.memory_space<vmem>>, %arg2: memref<8x8xf32, #tpu.memory_space<vmem>>, %arg3: memref<16x32xbf16, #tpu.memory_space<vmem>>, %arg4: memref<8x32xbf16, #tpu.memory_space<vmem>>, %arg5: memref<1x32xf32, #tpu.memory_space<vmem>>, %arg6: memref<32x32xbf16, #tpu.memory_space<vmem>>, %arg7: memref<1x32xf32, #tpu.memory_space<vmem>>, %arg8: memref<1x32xbf16, #tpu.memory_space<vmem>>, %arg9: memref<1x1xf32, #tpu.memory_space<vmem>>, %arg10: memref<1x8xf32, #tpu.memory_space<vmem>>) attributes {dimension_semantics = [#tpu.dimension_semantics<parallel>], iteration_bounds = array<i64: 1>, scalar_prefetch = 0 : i64, scratch_operands = 0 : i64, tpu.core_type = #tpu.core_type<tc>, window_params = [{transform_indices = @transform_0, window_bounds = array<i64: 8, 16>}, {transform_indices = @transform_1, window_bounds = array<i64: 8, 8>}, {pipeline_mode = #tpu.pipeline_mode<synchronous>, transform_indices = @transform_2, window_bounds = array<i64: 16, 32>}, {pipeline_mode = #tpu.pipeline_mode<synchronous>, transform_indices = @transform_3, window_bounds = array<i64: 8, 32>}, {pipeline_mode = #tpu.pipeline_mode<synchronous>, transform_indices = @transform_4, window_bounds = array<i64: 1, 32>}, {pipeline_mode = #tpu.pipeline_mode<synchronous>, transform_indices = @transform_5, window_bounds = array<i64: 32, 32>}, {pipeline_mode = #tpu.pipeline_mode<synchronous>, transform_indices = @transform_6, window_bounds = array<i64: 1, 32>}, {pipeline_mode = #tpu.pipeline_mode<synchronous>, transform_indices = @transform_7, window_bounds = array<i64: 1, 32>}, {pipeline_mode = #tpu.pipeline_mode<synchronous>, transform_indices = @transform_8, window_bounds = array<i64: 1, 1>}, {transform_indices = @transform_9, window_bounds = array<i64: 1, 8>}]} {
    %c0 = arith.constant 0 : index
    %c0_0 = arith.constant 0 : index
    %0 = vector.load %arg1[%c0, %c0_0] : memref<8x16xf32, #tpu.memory_space<vmem>>, vector<8x16xf32>
    %1 = arith.truncf %0 : vector<8x16xf32> to vector<8x16xbf16>
    %c0_1 = arith.constant 0 : index
    %c0_2 = arith.constant 0 : index
    %2 = vector.load %arg2[%c0_1, %c0_2] : memref<8x8xf32, #tpu.memory_space<vmem>>, vector<8x8xf32>
    %3 = arith.truncf %2 : vector<8x8xf32> to vector<8x8xbf16>
    %c0_3 = arith.constant 0 : index
    %c0_4 = arith.constant 0 : index
    %4 = vector.load %arg3[%c0_3, %c0_4] : memref<16x32xbf16, #tpu.memory_space<vmem>>, vector<16x32xbf16>
    %cst = arith.constant dense<0.000000e+00> : vector<8x32xf32>
    %5 = tpu.matmul %1, %4, %cst {dimension_numbers = #tpu.dot_dimension_numbers<[1], [0], [0], [1], [0, 0, 1, 1], [], []>} : vector<8x16xbf16>, vector<16x32xbf16>, vector<8x32xf32> -> vector<8x32xf32>
    %c0_5 = arith.constant 0 : index
    %c0_6 = arith.constant 0 : index
    %6 = vector.load %arg4[%c0_5, %c0_6] : memref<8x32xbf16, #tpu.memory_space<vmem>>, vector<8x32xbf16>
    %cst_7 = arith.constant dense<0.000000e+00> : vector<8x32xf32>
    %7 = tpu.matmul %3, %6, %cst_7 {dimension_numbers = #tpu.dot_dimension_numbers<[1], [0], [0], [1], [0, 0, 1, 1], [], []>} : vector<8x8xbf16>, vector<8x32xbf16>, vector<8x32xf32> -> vector<8x32xf32>
    %8 = arith.addf %5, %7 : vector<8x32xf32>
    %c0_8 = arith.constant 0 : index
    %c0_9 = arith.constant 0 : index
    %9 = vector.load %arg5[%c0_8, %c0_9] : memref<1x32xf32, #tpu.memory_space<vmem>>, vector<1x32xf32>
    %10 = vector.broadcast %9 : vector<1x32xf32> to vector<8x32xf32>
    %11 = arith.addf %8, %10 : vector<8x32xf32>
    %cst_10 = arith.constant 0.000000e+00 : f32
    %12 = vector.broadcast %cst_10 : f32 to vector<8x32xf32>
    %13 = arith.maximumf %11, %12 : vector<8x32xf32>
    %14 = arith.truncf %13 : vector<8x32xf32> to vector<8x32xbf16>
    %c0_11 = arith.constant 0 : index
    %c0_12 = arith.constant 0 : index
    %15 = vector.load %arg6[%c0_11, %c0_12] : memref<32x32xbf16, #tpu.memory_space<vmem>>, vector<32x32xbf16>
    %cst_13 = arith.constant dense<0.000000e+00> : vector<8x32xf32>
    %16 = tpu.matmul %14, %15, %cst_13 {dimension_numbers = #tpu.dot_dimension_numbers<[1], [0], [0], [1], [0, 0, 1, 1], [], []>} : vector<8x32xbf16>, vector<32x32xbf16>, vector<8x32xf32> -> vector<8x32xf32>
    %c0_14 = arith.constant 0 : index
    %c0_15 = arith.constant 0 : index
    %17 = vector.load %arg7[%c0_14, %c0_15] : memref<1x32xf32, #tpu.memory_space<vmem>>, vector<1x32xf32>
    %18 = vector.broadcast %17 : vector<1x32xf32> to vector<8x32xf32>
    %19 = arith.addf %16, %18 : vector<8x32xf32>
    %cst_16 = arith.constant 0.000000e+00 : f32
    %20 = vector.broadcast %cst_16 : f32 to vector<8x32xf32>
    %21 = arith.maximumf %19, %20 : vector<8x32xf32>
    %c0_17 = arith.constant 0 : index
    %c0_18 = arith.constant 0 : index
    %22 = vector.load %arg8[%c0_17, %c0_18] : memref<1x32xbf16, #tpu.memory_space<vmem>>, vector<1x32xbf16>
    %23 = arith.extf %22 : vector<1x32xbf16> to vector<1x32xf32>
    %24 = vector.broadcast %23 : vector<1x32xf32> to vector<8x32xf32>
    %25 = arith.mulf %21, %24 : vector<8x32xf32>
    %cst_19 = arith.constant dense<0.000000e+00> : vector<8xf32>
    %26 = vector.multi_reduction <add>, %25, %cst_19 [1] : vector<8x32xf32> to vector<8xf32>
    %27 = vector.shape_cast %26 : vector<8xf32> to vector<1x8xf32>
    %c0_20 = arith.constant 0 : index
    %c0_21 = arith.constant 0 : index
    %28 = vector.load %arg9[%c0_20, %c0_21] : memref<1x1xf32, #tpu.memory_space<vmem>>, vector<1x1xf32>
    %29 = vector.broadcast %28 : vector<1x1xf32> to vector<1x8xf32>
    %30 = arith.addf %27, %29 : vector<1x8xf32>
    %c0_22 = arith.constant 0 : index
    %c0_23 = arith.constant 0 : index
    %31 = vector.load %arg10[%c0_22, %c0_23] : memref<1x8xf32, #tpu.memory_space<vmem>>, vector<1x8xf32>
    tpu.vector_store %arg10[%c0_22, %c0_23], %30 {strides = array<i32>} : memref<1x8xf32, #tpu.memory_space<vmem>>, vector<1x8xf32>,
    return
  }
  func.func @transform_0(%arg0: i32) -> (i32, i32) {
    %c0_i32 = arith.constant 0 : i32
    %c0_i32_0 = arith.constant 0 : i32
    return %arg0, %c0_i32 : i32, i32
  }
  func.func @transform_1(%arg0: i32) -> (i32, i32) {
    %c0_i32 = arith.constant 0 : i32
    %c0_i32_0 = arith.constant 0 : i32
    return %arg0, %c0_i32 : i32, i32
  }
  func.func @transform_2(%arg0: i32) -> (i32, i32) {
    %c0_i32 = arith.constant 0 : i32
    %c0_i32_0 = arith.constant 0 : i32
    %c0_i32_1 = arith.constant 0 : i32
    return %c0_i32, %c0_i32_0 : i32, i32
  }
  func.func @transform_3(%arg0: i32) -> (i32, i32) {
    %c0_i32 = arith.constant 0 : i32
    %c0_i32_0 = arith.constant 0 : i32
    %c0_i32_1 = arith.constant 0 : i32
    return %c0_i32, %c0_i32_0 : i32, i32
  }
  func.func @transform_4(%arg0: i32) -> (i32, i32) {
    %c0_i32 = arith.constant 0 : i32
    %c0_i32_0 = arith.constant 0 : i32
    %c0_i32_1 = arith.constant 0 : i32
    return %c0_i32, %c0_i32_0 : i32, i32
  }
  func.func @transform_5(%arg0: i32) -> (i32, i32) {
    %c0_i32 = arith.constant 0 : i32
    %c0_i32_0 = arith.constant 0 : i32
    %c0_i32_1 = arith.constant 0 : i32
    return %c0_i32, %c0_i32_0 : i32, i32
  }
  func.func @transform_6(%arg0: i32) -> (i32, i32) {
    %c0_i32 = arith.constant 0 : i32
    %c0_i32_0 = arith.constant 0 : i32
    %c0_i32_1 = arith.constant 0 : i32
    return %c0_i32, %c0_i32_0 : i32, i32
  }
  func.func @transform_7(%arg0: i32) -> (i32, i32) {
    %c0_i32 = arith.constant 0 : i32
    %c0_i32_0 = arith.constant 0 : i32
    %c0_i32_1 = arith.constant 0 : i32
    return %c0_i32, %c0_i32_0 : i32, i32
  }
  func.func @transform_8(%arg0: i32) -> (i32, i32) {
    %c0_i32 = arith.constant 0 : i32
    %c0_i32_0 = arith.constant 0 : i32
    %c0_i32_1 = arith.constant 0 : i32
    return %c0_i32, %c0_i32_0 : i32, i32
  }
  func.func @transform_9(%arg0: i32) -> (i32, i32) {
    %c0_i32 = arith.constant 0 : i32
    %c0_i32_0 = arith.constant 0 : i32
    return %c0_i32, %arg0 : i32, i32
  }
}

</mosaic_0001>

<llo_original>
// kernel: tpu_custom_call.1
$region0: #{tpu_custom_call.1}
  #allocation0 [shape = 'u32[]', space=smem, size = 0x4, offset = 0x4, fixed_abs, tag = 'smem constant byte address 0x4 - core index']
  #allocation1 [shape = 'u32[144,128]{1,0:T(1,128)}', space=vmem, size = 0x12000, scoped, tag = 'internal scratch']
  #allocation2 [shape = 'f32[1,1]{1,0:T(1,128)S(1)}', space=vmem, size = 0x200, scoped, tag = 'scoped memory for tpu_custom_call.1']
  %s0 = inlined_call_operand.hbm [shape: f32[8,16], index: 0, kind: input, shape index: {}]
  %s1 = inlined_call_operand.hbm [shape: f32[8,8], index: 1, kind: input, shape index: {}]
  %s2 = inlined_call_operand.hbm [shape: bf16[16,32], index: 2, kind: input, shape index: {}]
  %s3 = inlined_call_operand.vmem [shape: bf16[8,32], index: 3, kind: input, shape index: {}]
  %s4 = inlined_call_operand.vmem [shape: f32[1,32], index: 4, kind: input, shape index: {}]
  %s5 = inlined_call_operand.vmem [shape: bf16[32,32], index: 5, kind: input, shape index: {}]
  %s6 = inlined_call_operand.vmem [shape: f32[1,32], index: 6, kind: input, shape index: {}]
  %s7 = inlined_call_operand.vmem [shape: bf16[1,32], index: 7, kind: input, shape index: {}]
  %s8 = inlined_call_operand.<no memory space> [shape: f32[1,1], index: 8, kind: input, shape index: {}]
  %s9 = inlined_call_operand.hbm [shape: f32[1,8], index: 9, kind: output, shape index: {}]
  %s10 = sld [smem:[#allocation0]]
  $region58: #{tpu_custom_call.1} parent=0
    _
  %s12 = ssub.s32 1, %s10
  %s13 = scalar_select 0, %s12, %s10
  %v14 = vstv %s8
  %15 = vst [vmem:[#allocation2] sm:$0x1] %v14
  $region1: #{tpu_custom_call.1} parent=0
    #allocation3 [shape = 'u8[4096]{0}', space=vmem, size = 0x1000, scoped, tag = 'input window, operand 0, single buffered']
    #allocation4 [shape = 's32[1]{0}', space=sflag, size = 0x4, scoped, tag = 'scoped memory for tpu_custom_call.1']
    #allocation5 [shape = 's32[1]{0}', space=sflag, size = 0x4, scoped, tag = 'scoped memory for tpu_custom_call.1']
    #allocation6 [shape = 'u8[4096]{0}', space=vmem, size = 0x1000, scoped, tag = 'input window, operand 1, single buffered']
    #allocation7 [shape = 's32[1]{0}', space=sflag, size = 0x4, scoped, tag = 'scoped memory for tpu_custom_call.1']
    #allocation8 [shape = 'u8[4096]{0}', space=vmem, size = 0x1000, scoped, tag = 'input window, operand 2, single buffered']
    #allocation9 [shape = 'u8[512]{0}', space=vmem, size = 0x400, scoped, tag = 'output window, operand 0, single buffered']
    %16 = vsyncpa [#allocation4], 0
    %17 = vsyncpa [#allocation7], 0
    %18 = vsyncpa [#allocation5], 0
    // Predicated region
    $region2: #{tpu_custom_call.1} parent=1 // pred_check
      _
    $region3: #{tpu_custom_call.1} parent=1 // pred_check_branch
      %20 = sbr.rel (0) target = $region5
    $region4: #{tpu_custom_call.1} parent=1 // pred_region
      %s22 = ssub.s32 128, 128
      %23 = vsyncadd [#allocation4], %s22
      %s25 = sshll.u32 [#allocation3], 4
      %s26 = int_to_ptr.vmem [resolvable:$true] %s25
      %28 = dma.hbm_to_vmem [thread:$0]  %s0, 128, %s26, [#allocation4]
    $region5: #{tpu_custom_call.1} parent=1 // pred_fallthru
      _
    // Predicated region
    $region6: #{tpu_custom_call.1} parent=1 // pred_check
      _
    $region7: #{tpu_custom_call.1} parent=1 // pred_check_branch
      %30 = sbr.rel (0) target = $region9
    $region8: #{tpu_custom_call.1} parent=1 // pred_region
      %s32 = ssub.s32 128, 128
      %33 = vsyncadd [#allocation7], %s32
      %s35 = sshll.u32 [#allocation6], 4
      %s36 = int_to_ptr.vmem [resolvable:$true] %s35
      %38 = dma.hbm_to_vmem [thread:$0]  %s1, 128, %s36, [#allocation7]
    $region9: #{tpu_custom_call.1} parent=1 // pred_fallthru
      _
    // Predicated region
    $region10: #{tpu_custom_call.1} parent=1 // pred_check
      _
    $region11: #{tpu_custom_call.1} parent=1 // pred_check_branch
      %40 = sbr.rel (0) target = $region13
    $region12: #{tpu_custom_call.1} parent=1 // pred_region
      %s42 = ssub.s32 128, 128
      %43 = vsyncadd [#allocation7], %s42
      %s44 = sshll.u32 [#allocation8], 4
      %s45 = int_to_ptr.vmem [resolvable:$true] %s44
      %50 = dma.hbm_to_vmem [thread:$0]  %s2, 128, %s45, [#allocation7], 64, 64, 4
    $region13: #{tpu_custom_call.1} parent=1 // pred_fallthru
      _
    // Predicated region
    $region14: #{tpu_custom_call.1} parent=1 // pred_check
      _
    $region15: #{tpu_custom_call.1} parent=1 // pred_check_branch
      %52 = sbr.rel (0) target = $region17
    $region16: #{tpu_custom_call.1} parent=1 // pred_region
      _
    $region17: #{tpu_custom_call.1} parent=1 // pred_fallthru
      _
    // Predicated region
    $region18: #{tpu_custom_call.1} parent=1 // pred_check
      _
    $region19: #{tpu_custom_call.1} parent=1 // pred_check_branch
      %54 = sbr.rel (0) target = $region21
    $region20: #{tpu_custom_call.1} parent=1 // pred_region
      _
    $region21: #{tpu_custom_call.1} parent=1 // pred_fallthru
      _
    // Predicated region
    $region22: #{tpu_custom_call.1} parent=1 // pred_check
      _
    $region23: #{tpu_custom_call.1} parent=1 // pred_check_branch
      %56 = sbr.rel (0) target = $region25
    $region24: #{tpu_custom_call.1} parent=1 // pred_region
      _
    $region25: #{tpu_custom_call.1} parent=1 // pred_fallthru
      _
    // Predicated region
    $region26: #{tpu_custom_call.1} parent=1 // pred_check
      _
    $region27: #{tpu_custom_call.1} parent=1 // pred_check_branch
      %58 = sbr.rel (0) target = $region29
    $region28: #{tpu_custom_call.1} parent=1 // pred_region
      _
    $region29: #{tpu_custom_call.1} parent=1 // pred_fallthru
      _
    // Predicated region
    $region30: #{tpu_custom_call.1} parent=1 // pred_check
      _
    $region31: #{tpu_custom_call.1} parent=1 // pred_check_branch
      %60 = sbr.rel (0) target = $region33
    $region32: #{tpu_custom_call.1} parent=1 // pred_region
      _
    $region33: #{tpu_custom_call.1} parent=1 // pred_fallthru
      _
    // Predicated region
    $region34: #{tpu_custom_call.1} parent=1 // pred_check
      _
    $region35: #{tpu_custom_call.1} parent=1 // pred_check_branch
      %62 = sbr.rel (0) target = $region37
    $region36: #{tpu_custom_call.1} parent=1 // pred_region
      _
    $region37: #{tpu_custom_call.1} parent=1 // pred_fallthru
      _
    // Predicated region
    $region38: #{tpu_custom_call.1} parent=1 // pred_check
      _
    $region39: #{tpu_custom_call.1} parent=1 // pred_check_branch
      %64 = sbr.rel (0) target = $region41
    $region40: #{tpu_custom_call.1} parent=1 // pred_region
      %65 = dma.done [#allocation4], 128
    $region41: #{tpu_custom_call.1} parent=1 // pred_fallthru
      _
    // Predicated region
    $region42: #{tpu_custom_call.1} parent=1 // pred_check
      _
    $region43: #{tpu_custom_call.1} parent=1 // pred_check_branch
      %67 = sbr.rel (0) target = $region45
    $region44: #{tpu_custom_call.1} parent=1 // pred_region
      %68 = dma.done [#allocation7], 128
    $region45: #{tpu_custom_call.1} parent=1 // pred_fallthru
      _
    // Predicated region
    $region46: #{tpu_custom_call.1} parent=1 // pred_check
      _
    $region47: #{tpu_custom_call.1} parent=1 // pred_check_branch
      %70 = sbr.rel (0) target = $region49
    $region48: #{tpu_custom_call.1} parent=1 // pred_region
      %71 = dma.done [#allocation7], 128
    $region49: #{tpu_custom_call.1} parent=1 // pred_fallthru
      _
    %v73 = vld [vmem:[#allocation3] sm:$0xff]
    %v74 = vpack.c.bf16 %v73, %v73
    %v75 = vld [vmem:[#allocation6] sm:$0xff]
    %v76 = vpack.c.bf16 %v75, %v75
    %v77 = vld [vmem:[#allocation8] sm:$0xf]
    %v78 = vld [vmem:[#allocation8 + $0x4] sm:$0xf]
    %v79 = vld [vmem:[%s3] sm:$0xf]
    %vm80 = vcmask 64512
    %v82 = vsel %vm80, %v76, 0
    %vm84 = vcmask 1043456
    %v86 = vsel %vm84, %v79, 0
    %88 = vmatprep.subr.bf16.mxu0 0
    %89 = vmatpush1.bf16.msra.mxu0 %v86
    %90 = vmatprep.subr.bf16.mxu0 0
    %91 = vmatpush1.bf16.msra.mxu0 0
    %92 = vmatprep.subr.bf16.mxu0 0
    %93 = vmatpush1.bf16.msra.mxu0 0
    %94 = vmatprep.subr.bf16.mxu0 0
    %95 = vmatpush1.bf16.msra.mxu0 0
    %96 = vmatprep.subr.bf16.mxu0 0
    %97 = vmatpush1.bf16.msra.mxu0 0
    %98 = vmatprep.subr.bf16.mxu0 0
    %99 = vmatpush1.bf16.msra.mxu0 0
    %100 = vmatprep.subr.bf16.mxu0 0
    %101 = vmatpush1.bf16.msra.mxu0 0
    %102 = vmatprep.subr.bf16.mxu0 0
    %103 = vmatpush1.bf16.msra.mxu0 0
    %104 = vmatprep.subr.bf16.mxu0 0
    %105 = vmatpush1.bf16.msra.mxu0 0
    %106 = vmatprep.subr.bf16.mxu0 0
    %107 = vmatpush1.bf16.msra.mxu0 0
    %108 = vmatprep.subr.bf16.mxu0 0
    %109 = vmatpush1.bf16.msra.mxu0 0
    %110 = vmatprep.subr.bf16.mxu0 0
    %111 = vmatpush1.bf16.msra.mxu0 0
    %112 = vmatprep.subr.bf16.mxu0 0
    %113 = vmatpush1.bf16.msra.mxu0 0
    %114 = vmatprep.subr.bf16.mxu0 0
    %115 = vmatpush1.bf16.msra.mxu0 0
    %116 = vmatprep.subr.bf16.mxu0 0
    %117 = vmatpush1.bf16.msra.mxu0 0
    %118 = vmatprep.subr.bf16.mxu0 0
    %119 = vmatpush1.bf16.msra.mxu0 0
    %120 = vmatprep.mubr.bf16.mxu0 0
    %121 = vmatmul.mubr.bf16.gmra.mrb[0].mxu0 %v82
    %v122 = vpop.f32.mrb[0].mxu0
    %v123 = vadd.f32 0.0, %v122
    %v124 = vpop.f32.mrb[0].mxu0
    %v125 = vpop.f32.mrb[0].mxu0
    %v126 = vpop.f32.mrb[0].mxu0
    %127 = vdwg.mxu0
    %v130 = vunpack.c.l.b16 %v77
    %v131 = vunpack.c.l.b16 %v78
    %v132 = vpack.c.b16 %v131, %v130
    %vm134 = vcmask 130048
    %v136 = vsel %vm134, %v74, 0
    %138 = vmatprep.subr.bf16.mxu0 0
    %139 = vmatpush1.bf16.msra.mxu0 %v132
    %140 = vmatprep.subr.bf16.mxu0 0
    %141 = vmatpush1.bf16.msra.mxu0 0
    %142 = vmatprep.subr.bf16.mxu0 0
    %143 = vmatpush1.bf16.msra.mxu0 0
    %144 = vmatprep.subr.bf16.mxu0 0
    %145 = vmatpush1.bf16.msra.mxu0 0
    %146 = vmatprep.subr.bf16.mxu0 0
    %147 = vmatpush1.bf16.msra.mxu0 0
    %148 = vmatprep.subr.bf16.mxu0 0
    %149 = vmatpush1.bf16.msra.mxu0 0
    %150 = vmatprep.subr.bf16.mxu0 0
    %151 = vmatpush1.bf16.msra.mxu0 0
    %152 = vmatprep.subr.bf16.mxu0 0
    %153 = vmatpush1.bf16.msra.mxu0 0
    %154 = vmatprep.subr.bf16.mxu0 0
    %155 = vmatpush1.bf16.msra.mxu0 0
    %156 = vmatprep.subr.bf16.mxu0 0
    %157 = vmatpush1.bf16.msra.mxu0 0
    %158 = vmatprep.subr.bf16.mxu0 0
    %159 = vmatpush1.bf16.msra.mxu0 0
    %160 = vmatprep.subr.bf16.mxu0 0
    %161 = vmatpush1.bf16.msra.mxu0 0
    %162 = vmatprep.subr.bf16.mxu0 0
    %163 = vmatpush1.bf16.msra.mxu0 0
    %164 = vmatprep.subr.bf16.mxu0 0
    %165 = vmatpush1.bf16.msra.mxu0 0
    %166 = vmatprep.subr.bf16.mxu0 0
    %167 = vmatpush1.bf16.msra.mxu0 0
    %168 = vmatprep.subr.bf16.mxu0 0
    %169 = vmatpush1.bf16.msra.mxu0 0
    %170 = vmatprep.mubr.bf16.mxu0 0
    %171 = vmatmul.mubr.bf16.gmra.mrb[0].mxu0 %v136
    %v172 = vpop.f32.mrb[0].mxu0
    %v173 = vadd.f32 %v123, %v172
    %v174 = vpop.f32.mrb[0].mxu0
    %v175 = vpop.f32.mrb[0].mxu0
    %v176 = vpop.f32.mrb[0].mxu0
    %177 = vdwg.mxu0
    %v178 = vld [vmem:[%s4] sm:$0x1]
    %v180 = vlaneseq
    %v181 = vshrl.u32 %v180, 7
    %v182 = vsub.s32 0, %v181
    %v183 = vrot.slane %v178, %v182
    %v185 = vadd.f32 %v173, %v183
    %v186 = vmax.f32 %v185, 0.0
    %v187 = vpack.c.bf16 %v186, %v186
    %v188 = vld [vmem:[%s5] sm:$0xf]
    %v189 = vld [vmem:[%s5 + $0x4] sm:$0xf]
    %v190 = vld [vmem:[%s5 + $0x8] sm:$0xf]
    %v191 = vld [vmem:[%s5 + $0xc] sm:$0xf]
    %v192 = vld [vmem:[%s6] sm:$0x1]
    %v194 = vlaneseq
    %v195 = vshrl.u32 %v194, 7
    %v196 = vsub.s32 0, %v195
    %v197 = vrot.slane %v192, %v196
    %v203 = vunpack.c.l.b16 %v188
    %v204 = vunpack.c.l.b16 %v189
    %v205 = vunpack.c.l.b16 %v190
    %v206 = vunpack.c.l.b16 %v191
    %v207 = vpack.c.b16 %v204, %v203
    %v208 = vpack.c.b16 %v206, %v205
    %vm211 = vcmask 261120
    %v213 = vsel %vm211, %v187, 0
    %215 = vmatprep.subr.bf16.mxu0 0
    %216 = vmatpush1.bf16.msra.mxu0 %v207
    %217 = vmatprep.subr.bf16.mxu0 0
    %218 = vmatpush1.bf16.msra.mxu0 %v208
    %219 = vmatprep.subr.bf16.mxu0 0
    %220 = vmatpush1.bf16.msra.mxu0 0
    %221 = vmatprep.subr.bf16.mxu0 0
    %222 = vmatpush1.bf16.msra.mxu0 0
    %223 = vmatprep.subr.bf16.mxu0 0
    %224 = vmatpush1.bf16.msra.mxu0 0
    %225 = vmatprep.subr.bf16.mxu0 0
    %226 = vmatpush1.bf16.msra.mxu0 0
    %227 = vmatprep.subr.bf16.mxu0 0
    %228 = vmatpush1.bf16.msra.mxu0 0
    %229 = vmatprep.subr.bf16.mxu0 0
    %230 = vmatpush1.bf16.msra.mxu0 0
    %231 = vmatprep.subr.bf16.mxu0 0
    %232 = vmatpush1.bf16.msra.mxu0 0
    %233 = vmatprep.subr.bf16.mxu0 0
    %234 = vmatpush1.bf16.msra.mxu0 0
    %235 = vmatprep.subr.bf16.mxu0 0
    %236 = vmatpush1.bf16.msra.mxu0 0
    %237 = vmatprep.subr.bf16.mxu0 0
    %238 = vmatpush1.bf16.msra.mxu0 0
    %239 = vmatprep.subr.bf16.mxu0 0
    %240 = vmatpush1.bf16.msra.mxu0 0
    %241 = vmatprep.subr.bf16.mxu0 0
    %242 = vmatpush1.bf16.msra.mxu0 0
    %243 = vmatprep.subr.bf16.mxu0 0
    %244 = vmatpush1.bf16.msra.mxu0 0
    %245 = vmatprep.subr.bf16.mxu0 0
    %246 = vmatpush1.bf16.msra.mxu0 0
    %247 = vmatprep.mubr.bf16.mxu0 0
    %248 = vmatmul.mubr.bf16.gmra.mrb[0].mxu0 %v213
    %v249 = vpop.f32.mrb[0].mxu0
    %v250 = vadd.f32 %v197, %v249
    %v251 = vpop.f32.mrb[0].mxu0
    %v252 = vpop.f32.mrb[0].mxu0
    %v253 = vpop.f32.mrb[0].mxu0
    %254 = vdwg.mxu0
    %v255 = vmax.f32 %v250, 0.0
    %v256 = vld [vmem:[%s7] sm:$0x1]
    %v257 = vunpack.c.l.bf16 %v256
    %v258 = vlaneseq
    %v259 = vshrl.u32 %v258, 7
    %v260 = vsub.s32 0, %v259
    %v261 = vrot.slane %v257, %v260
    %v262 = vmul.f32 %v255, %v261
    %v263 = vsel %vm211, %v262, 0.0
    %264 = vadd.xlane.f32.xlu0 %v263
    %v265 = vpop.xlane.xlu0 %264
    %v266 = vld [vmem:[#allocation2] sm:$0x1]
    %268 = vset.pattern.permute.xlu0 0
    %269 = vperm.xlu0 %268, %v266
    %v270 = vpop.permute.xlu0 %269
    %v272 = vlaneseq
    %v273 = vshrl.u32 %v272, 7
    %v274 = vsub.s32 0, %v273
    %v275 = vrot.slane %v270, %v274
    %v276 = vadd.f32 %v265, %v275
    %v278 = vlaneseq
    %v279 = vand.u32 %v278, 127
    %v280 = vlaneseq
    %v281 = vshrl.u32 %v280, 7
    %v282 = vsub.s32 %v279, %v281
    %v283 = vrot.slane %v276, %v282
    %vm285 = vcmask 57344
    %286 = vst.msk [vmem:[#allocation9] sm:$0x1] %vm285, %v283
    // Predicated region
    $region50: #{tpu_custom_call.1} parent=1 // pred_check
      _
    $region51: #{tpu_custom_call.1} parent=1 // pred_check_branch
      %288 = sbr.rel (0) target = $region53
    $region52: #{tpu_custom_call.1} parent=1 // pred_region
      %s290 = ssub.s32 16, 16
      %291 = vsyncadd [#allocation5], %s290
      %s293 = sshll.u32 [#allocation9], 4
      %s294 = int_to_ptr.vmem [resolvable:$true] %s293
      %296 = dma.vmem_to_hbm [thread:$0]  %s294, 16, %s9, [#allocation5]
    $region53: #{tpu_custom_call.1} parent=1 // pred_fallthru
      _
    // Predicated region
    $region54: #{tpu_custom_call.1} parent=1 // pred_check
      _
    $region55: #{tpu_custom_call.1} parent=1 // pred_check_branch
      %298 = sbr.rel (0) target = $region57
    $region56: #{tpu_custom_call.1} parent=1 // pred_region
      %299 = dma.done [#allocation5], 16
    $region57: #{tpu_custom_call.1} parent=1 // pred_fallthru
      _
    %300 = vsyncpa [#allocation4], 1
    %301 = vsyncpa [#allocation7], 1
    %302 = vsyncpa [#allocation5], 1

</llo_original>
